<compile_context>
chip_gen: v5e
topology: v5e:2x2
jax: 0.10.0
libtpu: 0.0.40
codegen_flags: <defaults>
</compile_context>

<pallas_src>
import jax
import jax.numpy as jnp
from jax.experimental import pallas as pl
from jax.experimental.pallas import tpu as pltpu

LANE = 128          # lane-dense padded feature width
NEG_SLOPE = 0.01    # F.leaky_relu default negative_slope


# ----------------------------------------------------------------------------
# Fused Pallas kernel: whole 2-layer hetero-GCN forward
# ----------------------------------------------------------------------------
def fused_gcn_kernel(a_ref, x_ref, w1_ref, b1_ref, w2_ref, b2_ref, o_ref):
    """a: (N,N) combined row-normalized adjacency; x: (N,F) stacked padded feats;
    w1/w2: (F,F) pre-transposed zero-padded Linear weights; b1/b2: (1,F)."""
    # ---- layer 1: Wh = X @ W1^T + b1 ; h1 = A @ Wh (mean per etype, summed) ----
    wh1 = jnp.dot(x_ref[...], w1_ref[...], preferred_element_type=jnp.float32)
    wh1 = wh1 + b1_ref[...]
    h1 = jnp.dot(a_ref[...], wh1, preferred_element_type=jnp.float32)
    # fused leaky_relu epilogue (free VPU work under MXU slack)
    h1 = jnp.where(h1 >= 0, h1, NEG_SLOPE * h1)
    # ---- layer 2 ---------------------------------------------------------------
    wh2 = jnp.dot(h1, w2_ref[...], preferred_element_type=jnp.float32)
    wh2 = wh2 + b2_ref[...]
    o_ref[...] = jnp.dot(a_ref[...], wh2, preferred_element_type=jnp.float32)


_VMEM = pl.BlockSpec(memory_space=pltpu.MemorySpace.VMEM)


@jax.jit
def normal_gcn_forward(a_comb, x_pad, w1t, b1, w2t, b2):
    n, f = x_pad.shape
    return pl.pallas_call(
        fused_gcn_kernel,
        out_shape=jax.ShapeDtypeStruct((n, f), jnp.float32),
        in_specs=[_VMEM] * 6,
        out_specs=_VMEM,
    )(a_comb, x_pad, w1t, b1, w2t, b2)


# ----------------------------------------------------------------------------
# One-time setup helpers (run once, outside the hot path)
# ----------------------------------------------------------------------------
def pad2(x, rows, cols):
    return jnp.pad(x, ((0, rows - x.shape[0]), (0, cols - x.shape[1])))


def build_combined_adjacency(canonical_etypes, adj_norm, num_nodes, ntype_order):
    """Stack node types into one node set and place each etype's row-normalized
    adjacency into its (dst-block, src-block) position. Cross-etype 'sum' then
    falls out of one matmul."""
    offsets, off = {}, 0
    for nt in ntype_order:
        offsets[nt] = off
        off += num_nodes[nt]
    n_total = off
    a = jnp.zeros((n_total, n_total), jnp.float32)
    for src, etype, dst in canonical_etypes:
        blk = adj_norm[etype]
        r0, c0 = offsets[dst], offsets[src]
        a = a.at[r0:r0 + blk.shape[0], c0:c0 + blk.shape[1]].add(blk)
    return a, offsets, n_total


def xavier_uniform(key, shape):
    fan_out, fan_in = shape[0], shape[1]
    bound = (6.0 / (fan_in + fan_out)) ** 0.5
    return jax.random.uniform(key, shape, jnp.float32, -bound, bound)


def make_adj_norm(key, n_dst, n_src):
    """Random 0/1 adjacency (dst x src), row-normalized by in-degree (mean)."""
    a = jax.random.bernoulli(key, p=0.3, shape=(n_dst, n_src)).astype(jnp.float32)
    a = a.at[jnp.arange(n_dst), jnp.arange(n_dst) % n_src].set(1.0)
    deg = a.sum(axis=1, keepdims=True)
    return jnp.where(deg > 0, a / jnp.maximum(deg, 1.0), 0.0)


# ----------------------------------------------------------------------------
# Pure-JAX reference (per-etype path, matches the PyTorch/DGL module)
# ----------------------------------------------------------------------------
def reference_forward(canonical_etypes, adj_norm, num_nodes, embed, W1, b1, W2, b2):
    hp = jax.lax.Precision.HIGHEST

    def layer(feat, W, b):
        h = {nt: jnp.zeros((n, W.shape[0]), jnp.float32) for nt, n in num_nodes.items()}
        for src, e, dst in canonical_etypes:
            wh = jnp.dot(feat[src], W.T, precision=hp) + b
            h[dst] = h[dst] + jnp.dot(adj_norm[e], wh, precision=hp)
        return h

    h = layer(embed, W1, b1)
    h = {k: jnp.where(v >= 0, v, NEG_SLOPE * v) for k, v in h.items()}
    return layer(h, W2, b2)


# ----------------------------------------------------------------------------
# Main
# ----------------------------------------------------------------------------
if __name__ == "__main__":
    key = jax.random.PRNGKey(0)

    # --- synthetic heterogeneous graph ---------------------------------------
    num_nodes = {"user": 16, "item": 32}
    ntype_order = ["user", "item"]
    canonical_etypes = [
        ("user", "follows", "user"),
        ("user", "buys", "item"),
        ("item", "bought_by", "user"),
    ]
    in_size, hidden_size, out_size = 32, 64, 16

    keys = jax.random.split(key, 16)
    adj_norm = {
        "follows":   make_adj_norm(keys[0], num_nodes["user"], num_nodes["user"]),
        "buys":      make_adj_norm(keys[1], num_nodes["item"], num_nodes["user"]),
        "bought_by": make_adj_norm(keys[2], num_nodes["user"], num_nodes["item"]),
    }

    # --- parameters (shapes match the PyTorch module) -------------------------
    embed = {
        "user": xavier_uniform(keys[3], (num_nodes["user"], in_size)),
        "item": xavier_uniform(keys[4], (num_nodes["item"], in_size)),
    }
    W1 = xavier_uniform(keys[5], (hidden_size, in_size))            # (out,in) like nn.Linear
    b1 = jax.random.uniform(keys[6], (hidden_size,), jnp.float32, -0.1, 0.1)
    W2 = xavier_uniform(keys[7], (out_size, hidden_size))
    b2 = jax.random.uniform(keys[8], (out_size,), jnp.float32, -0.1, 0.1)

    # --- one-time prep: combined adjacency + lane-dense (128-wide) padding ----
    a_comb, offsets, n_total = build_combined_adjacency(
        canonical_etypes, adj_norm, num_nodes, ntype_order)
    x_stack = jnp.concatenate([embed[nt] for nt in ntype_order], axis=0)
    x_pad = pad2(x_stack, n_total, LANE)                 # (48, 128)
    w1t = pad2(W1.T, LANE, LANE)                         # (in,hidden) -> (128,128)
    b1p = pad2(b1.reshape(1, -1), 1, LANE)               # (1, 128)
    w2t = pad2(W2.T, LANE, LANE)                         # (hidden,out) -> (128,128)
    b2p = pad2(b2.reshape(1, -1), 1, LANE)               # (1, 128)

    # --- single fused, jitted kernel launch for the whole forward -------------
    out_pad = jax.block_until_ready(
        normal_gcn_forward(a_comb, x_pad, w1t, b1p, w2t, b2p))

    h_dict = {
        nt: out_pad[offsets[nt]:offsets[nt] + num_nodes[nt], :out_size]
        for nt in ntype_order
    }

    # --- checks ----------------------------------------------------------------
    assert h_dict["user"].shape == (num_nodes["user"], out_size)
    assert h_dict["item"].shape == (num_nodes["item"], out_size)
    assert all(bool(jnp.all(jnp.isfinite(v))) for v in h_dict.values())

    ref = reference_forward(canonical_etypes, adj_norm, num_nodes,
                            embed, W1, b1, W2, b2)
    for nt in ntype_order:
        assert bool(jnp.allclose(h_dict[nt], ref[nt], rtol=2e-3, atol=2e-3)), nt

    print("KERNEL_OK")
</pallas_src>

<mosaic_0001>
module attributes {stable_mosaic.version = 11 : i64} {
  func.func @fused_gcn_kernel(%arg0: memref<48x48xf32, #tpu.memory_space<vmem>>, %arg1: memref<48x128xf32, #tpu.memory_space<vmem>>, %arg2: memref<128x128xf32, #tpu.memory_space<vmem>>, %arg3: memref<1x128xf32, #tpu.memory_space<vmem>>, %arg4: memref<128x128xf32, #tpu.memory_space<vmem>>, %arg5: memref<1x128xf32, #tpu.memory_space<vmem>>, %arg6: memref<48x128xf32, #tpu.memory_space<vmem>>) attributes {dimension_semantics = [], scalar_prefetch = 0 : i64, scratch_operands = 0 : i64, tpu.core_type = #tpu.core_type<tc>} {
    %c0 = arith.constant 0 : index
    %c0_0 = arith.constant 0 : index
    %0 = vector.load %arg1[%c0, %c0_0] : memref<48x128xf32, #tpu.memory_space<vmem>>, vector<48x128xf32>
    %c0_1 = arith.constant 0 : index
    %c0_2 = arith.constant 0 : index
    %1 = vector.load %arg2[%c0_1, %c0_2] : memref<128x128xf32, #tpu.memory_space<vmem>>, vector<128x128xf32>
    %cst = arith.constant dense<0.000000e+00> : vector<48x128xf32>
    %2 = tpu.matmul %0, %1, %cst {dimension_numbers = #tpu.dot_dimension_numbers<[1], [0], [0], [1], [0, 0, 1, 1], [], []>} : vector<48x128xf32>, vector<128x128xf32>, vector<48x128xf32> -> vector<48x128xf32>
    %c0_3 = arith.constant 0 : index
    %c0_4 = arith.constant 0 : index
    %3 = vector.load %arg3[%c0_3, %c0_4] : memref<1x128xf32, #tpu.memory_space<vmem>>, vector<1x128xf32>
    %4 = vector.broadcast %3 : vector<1x128xf32> to vector<48x128xf32>
    %5 = arith.addf %2, %4 : vector<48x128xf32>
    %c0_5 = arith.constant 0 : index
    %c0_6 = arith.constant 0 : index
    %6 = vector.load %arg0[%c0_5, %c0_6] : memref<48x48xf32, #tpu.memory_space<vmem>>, vector<48x48xf32>
    %cst_7 = arith.constant dense<0.000000e+00> : vector<48x128xf32>
    %7 = tpu.matmul %6, %5, %cst_7 {dimension_numbers = #tpu.dot_dimension_numbers<[1], [0], [0], [1], [0, 0, 1, 1], [], []>} : vector<48x48xf32>, vector<48x128xf32>, vector<48x128xf32> -> vector<48x128xf32>
    %cst_8 = arith.constant 0.000000e+00 : f32
    %8 = vector.broadcast %cst_8 : f32 to vector<48x128xf32>
    %9 = arith.cmpf oge, %7, %8 : vector<48x128xf32>
    %cst_9 = arith.constant 0.00999999977 : f32
    %10 = vector.broadcast %cst_9 : f32 to vector<48x128xf32>
    %11 = arith.mulf %10, %7 : vector<48x128xf32>
    %12 = arith.select %9, %7, %11 : vector<48x128xi1>, vector<48x128xf32>
    %c0_10 = arith.constant 0 : index
    %c0_11 = arith.constant 0 : index
    %13 = vector.load %arg4[%c0_10, %c0_11] : memref<128x128xf32, #tpu.memory_space<vmem>>, vector<128x128xf32>
    %cst_12 = arith.constant dense<0.000000e+00> : vector<48x128xf32>
    %14 = tpu.matmul %12, %13, %cst_12 {dimension_numbers = #tpu.dot_dimension_numbers<[1], [0], [0], [1], [0, 0, 1, 1], [], []>} : vector<48x128xf32>, vector<128x128xf32>, vector<48x128xf32> -> vector<48x128xf32>
    %c0_13 = arith.constant 0 : index
    %c0_14 = arith.constant 0 : index
    %15 = vector.load %arg5[%c0_13, %c0_14] : memref<1x128xf32, #tpu.memory_space<vmem>>, vector<1x128xf32>
    %16 = vector.broadcast %15 : vector<1x128xf32> to vector<48x128xf32>
    %17 = arith.addf %14, %16 : vector<48x128xf32>
    %c0_15 = arith.constant 0 : index
    %c0_16 = arith.constant 0 : index
    %18 = vector.load %arg0[%c0_15, %c0_16] : memref<48x48xf32, #tpu.memory_space<vmem>>, vector<48x48xf32>
    %cst_17 = arith.constant dense<0.000000e+00> : vector<48x128xf32>
    %19 = tpu.matmul %18, %17, %cst_17 {dimension_numbers = #tpu.dot_dimension_numbers<[1], [0], [0], [1], [0, 0, 1, 1], [], []>} : vector<48x48xf32>, vector<48x128xf32>, vector<48x128xf32> -> vector<48x128xf32>
    %c0_18 = arith.constant 0 : index
    %c0_19 = arith.constant 0 : index
    %20 = vector.load %arg6[%c0_18, %c0_19] : memref<48x128xf32, #tpu.memory_space<vmem>>, vector<48x128xf32>
    tpu.vector_store %arg6[%c0_18, %c0_19], %19 {strides = array<i32>} : memref<48x128xf32, #tpu.memory_space<vmem>>, vector<48x128xf32>,
    return
  }
}

</mosaic_0001>

<llo_original>
// kernel: normal_gcn_forward.1
$region0: #{normal_gcn_forward.1}
  #allocation0 [shape = 'u32[]', space=smem, size = 0x4, offset = 0x4, fixed_abs, tag = 'smem constant byte address 0x4 - core index']
  #allocation1 [shape = 'u32[72,128]{1,0:T(1,128)}', space=vmem, size = 0x9000, scoped, tag = 'internal scratch']
  %s0 = inlined_call_operand.hbm [shape: f32[48,48], index: 0, kind: input, shape index: {}]
  %s1 = inlined_call_operand.hbm [shape: f32[48,128], index: 1, kind: input, shape index: {}]
  %s2 = inlined_call_operand.hbm [shape: f32[128,128], index: 2, kind: input, shape index: {}]
  %s3 = inlined_call_operand.vmem [shape: f32[1,128], index: 3, kind: input, shape index: {}]
  %s4 = inlined_call_operand.hbm [shape: f32[128,128], index: 4, kind: input, shape index: {}]
  %s5 = inlined_call_operand.vmem [shape: f32[1,128], index: 5, kind: input, shape index: {}]
  %s6 = inlined_call_operand.hbm [shape: f32[48,128], index: 6, kind: output, shape index: {}]
  %s7 = sld [smem:[#allocation0]]
  $region50: #{normal_gcn_forward.1} parent=0
    _
  %s9 = ssub.s32 1, %s7
  %s10 = scalar_select 0, %s9, %s7
  $region1: #{normal_gcn_forward.1} parent=0
    #allocation2 [shape = 'u8[24576]{0}', space=vmem, size = 0x6000, scoped, tag = 'input window, operand 0, single buffered']
    #allocation3 [shape = 's32[1]{0}', space=sflag, size = 0x4, scoped, tag = 'scoped memory for normal_gcn_forward.1']
    #allocation4 [shape = 's32[1]{0}', space=sflag, size = 0x4, scoped, tag = 'scoped memory for normal_gcn_forward.1']
    #allocation5 [shape = 'u8[24576]{0}', space=vmem, size = 0x6000, scoped, tag = 'input window, operand 1, single buffered']
    #allocation6 [shape = 's32[1]{0}', space=sflag, size = 0x4, scoped, tag = 'scoped memory for normal_gcn_forward.1']
    #allocation7 [shape = 'u8[65536]{0}', space=vmem, size = 0x10000, scoped, tag = 'input window, operand 2, single buffered']
    #allocation8 [shape = 'u8[65536]{0}', space=vmem, size = 0x10000, scoped, tag = 'input window, operand 4, single buffered']
    #allocation9 [shape = 's32[1]{0}', space=sflag, size = 0x4, scoped, tag = 'scoped memory for normal_gcn_forward.1']
    #allocation10 [shape = 'u8[24576]{0}', space=vmem, size = 0x6000, scoped, tag = 'output window, operand 0, single buffered']
    %11 = vsyncpa [#allocation3], 0
    %12 = vsyncpa [#allocation6], 0
    %13 = vsyncpa [#allocation9], 0
    %14 = vsyncpa [#allocation4], 0
    // Predicated region
    $region2: #{normal_gcn_forward.1} parent=1 // pred_check
      _
    $region3: #{normal_gcn_forward.1} parent=1 // pred_check_branch
      %16 = sbr.rel (0) target = $region5
    $region4: #{normal_gcn_forward.1} parent=1 // pred_region
      %18 = vsyncadd [#allocation3], 0
      %s19 = sshll.u32 %s0, 4
      %s20 = int_to_ptr.hbm [resolvable:$true] %s19
      %s21 = sshll.u32 [#allocation2], 4
      %s22 = int_to_ptr.vmem [resolvable:$true] %s21
      %27 = dma.hbm_to_vmem [thread:$0]  %s20, 768, %s22, [#allocation3], 128, 128, 8
    $region5: #{normal_gcn_forward.1} parent=1 // pred_fallthru
      _
    // Predicated region
    $region6: #{normal_gcn_forward.1} parent=1 // pred_check
      _
    $region7: #{normal_gcn_forward.1} parent=1 // pred_check_branch
      %29 = sbr.rel (0) target = $region9
    $region8: #{normal_gcn_forward.1} parent=1 // pred_region
      %31 = vsyncadd [#allocation6], 0
      %s32 = sshll.u32 %s1, 4
      %s33 = int_to_ptr.hbm [resolvable:$true] %s32
      %s34 = sshll.u32 [#allocation5], 4
      %s35 = int_to_ptr.vmem [resolvable:$true] %s34
      %40 = dma.hbm_to_vmem [thread:$0]  %s33, 768, %s35, [#allocation6], 128, 128, 8
    $region9: #{normal_gcn_forward.1} parent=1 // pred_fallthru
      _
    // Predicated region
    $region10: #{normal_gcn_forward.1} parent=1 // pred_check
      _
    $region11: #{normal_gcn_forward.1} parent=1 // pred_check_branch
      %42 = sbr.rel (0) target = $region13
    $region12: #{normal_gcn_forward.1} parent=1 // pred_region
      %44 = vsyncadd [#allocation6], 0
      %s45 = sshll.u32 %s2, 4
      %s46 = int_to_ptr.hbm [resolvable:$true] %s45
      %s47 = sshll.u32 [#allocation7], 4
      %s48 = int_to_ptr.vmem [resolvable:$true] %s47
      %53 = dma.hbm_to_vmem [thread:$0]  %s46, 2048, %s48, [#allocation6], 128, 128, 8
    $region13: #{normal_gcn_forward.1} parent=1 // pred_fallthru
      _
    // Predicated region
    $region14: #{normal_gcn_forward.1} parent=1 // pred_check
      _
    $region15: #{normal_gcn_forward.1} parent=1 // pred_check_branch
      %55 = sbr.rel (0) target = $region17
    $region16: #{normal_gcn_forward.1} parent=1 // pred_region
      _
    $region17: #{normal_gcn_forward.1} parent=1 // pred_fallthru
      _
    // Predicated region
    $region18: #{normal_gcn_forward.1} parent=1 // pred_check
      _
    $region19: #{normal_gcn_forward.1} parent=1 // pred_check_branch
      %57 = sbr.rel (0) target = $region21
    $region20: #{normal_gcn_forward.1} parent=1 // pred_region
      %59 = vsyncadd [#allocation9], 0
      %s60 = sshll.u32 %s4, 4
      %s61 = int_to_ptr.hbm [resolvable:$true] %s60
      %s62 = sshll.u32 [#allocation8], 4
      %s63 = int_to_ptr.vmem [resolvable:$true] %s62
      %68 = dma.hbm_to_vmem [thread:$0]  %s61, 2048, %s63, [#allocation9], 128, 128, 8
    $region21: #{normal_gcn_forward.1} parent=1 // pred_fallthru
      _
    // Predicated region
    $region22: #{normal_gcn_forward.1} parent=1 // pred_check
      _
    $region23: #{normal_gcn_forward.1} parent=1 // pred_check_branch
      %70 = sbr.rel (0) target = $region25
    $region24: #{normal_gcn_forward.1} parent=1 // pred_region
      _
    $region25: #{normal_gcn_forward.1} parent=1 // pred_fallthru
      _
    // Predicated region
    $region26: #{normal_gcn_forward.1} parent=1 // pred_check
      _
    $region27: #{normal_gcn_forward.1} parent=1 // pred_check_branch
      %72 = sbr.rel (0) target = $region29
    $region28: #{normal_gcn_forward.1} parent=1 // pred_region
      %74 = dma.done [#allocation3], 768
    $region29: #{normal_gcn_forward.1} parent=1 // pred_fallthru
      _
    // Predicated region
    $region30: #{normal_gcn_forward.1} parent=1 // pred_check
      _
    $region31: #{normal_gcn_forward.1} parent=1 // pred_check_branch
      %76 = sbr.rel (0) target = $region33
    $region32: #{normal_gcn_forward.1} parent=1 // pred_region
      %78 = dma.done [#allocation6], 768
    $region33: #{normal_gcn_forward.1} parent=1 // pred_fallthru
      _
    // Predicated region
    $region34: #{normal_gcn_forward.1} parent=1 // pred_check
      _
    $region35: #{normal_gcn_forward.1} parent=1 // pred_check_branch
      %80 = sbr.rel (0) target = $region37
    $region36: #{normal_gcn_forward.1} parent=1 // pred_region
      %82 = dma.done [#allocation6], 2048
    $region37: #{normal_gcn_forward.1} parent=1 // pred_fallthru
      _
    // Predicated region
    $region38: #{normal_gcn_forward.1} parent=1 // pred_check
      _
    $region39: #{normal_gcn_forward.1} parent=1 // pred_check_branch
      %84 = sbr.rel (0) target = $region41
    $region40: #{normal_gcn_forward.1} parent=1 // pred_region
      %86 = dma.done [#allocation9], 2048
    $region41: #{normal_gcn_forward.1} parent=1 // pred_fallthru
      _
    %v87 = vld [vmem:[#allocation5] sm:$0xff]
    %v88 = vld [vmem:[#allocation5 + $0x8] sm:$0xff]
    %v89 = vld [vmem:[#allocation5 + $0x10] sm:$0xff]
    %v90 = vld [vmem:[#allocation5 + $0x18] sm:$0xff]
    %v91 = vld [vmem:[#allocation5 + $0x20] sm:$0xff]
    %v92 = vld [vmem:[#allocation5 + $0x28] sm:$0xff]
    %v93 = vld [vmem:[#allocation7] sm:$0xff]
    %v94 = vld [vmem:[#allocation7 + $0x8] sm:$0xff]
    %v95 = vld [vmem:[#allocation7 + $0x10] sm:$0xff]
    %v96 = vld [vmem:[#allocation7 + $0x18] sm:$0xff]
    %v97 = vld [vmem:[#allocation7 + $0x20] sm:$0xff]
    %v98 = vld [vmem:[#allocation7 + $0x28] sm:$0xff]
    %v99 = vld [vmem:[#allocation7 + $0x30] sm:$0xff]
    %v100 = vld [vmem:[#allocation7 + $0x38] sm:$0xff]
    %v101 = vld [vmem:[#allocation7 + $0x40] sm:$0xff]
    %v102 = vld [vmem:[#allocation7 + $0x48] sm:$0xff]
    %v103 = vld [vmem:[#allocation7 + $0x50] sm:$0xff]
    %v104 = vld [vmem:[#allocation7 + $0x58] sm:$0xff]
    %v105 = vld [vmem:[#allocation7 + $0x60] sm:$0xff]
    %v106 = vld [vmem:[#allocation7 + $0x68] sm:$0xff]
    %v107 = vld [vmem:[#allocation7 + $0x70] sm:$0xff]
    %v108 = vld [vmem:[#allocation7 + $0x78] sm:$0xff]
    %v109 = vld [vmem:[%s3] sm:$0x1]
    %v111 = vperm.slane %v109, 0
    %113 = vmatpush.msra.mxu0 %v108
    %114 = vmatpush.msra.mxu0 %v107
    %115 = vmatpush.msra.mxu0 %v106
    %116 = vmatpush.msra.mxu0 %v105
    %117 = vmatpush.msra.mxu0 %v104
    %118 = vmatpush.msra.mxu0 %v103
    %119 = vmatpush.msra.mxu0 %v102
    %120 = vmatpush.msra.mxu0 %v101
    %121 = vmatpush.msra.mxu0 %v100
    %122 = vmatpush.msra.mxu0 %v99
    %123 = vmatpush.msra.mxu0 %v98
    %124 = vmatpush.msra.mxu0 %v97
    %125 = vmatpush.msra.mxu0 %v96
    %126 = vmatpush.msra.mxu0 %v95
    %127 = vmatpush.msra.mxu0 %v94
    %128 = vmatpush.msra.mxu0 %v93
    %129 = vmatmul.f32.gmra.mxu0 %v87
    %v130 = vpop.f32.mrf.mxu0
    %v131 = vadd.f32 %v111, %v130
    %132 = vmatmul.f32.gmra.mxu0 %v88
    %v133 = vpop.f32.mrf.mxu0
    %v134 = vadd.f32 %v111, %v133
    %135 = vmatmul.f32.gmra.mxu0 %v89
    %v136 = vpop.f32.mrf.mxu0
    %v137 = vadd.f32 %v111, %v136
    %138 = vmatmul.f32.gmra.mxu0 %v90
    %v139 = vpop.f32.mrf.mxu0
    %v140 = vadd.f32 %v111, %v139
    %141 = vmatmul.f32.gmra.mxu0 %v91
    %v142 = vpop.f32.mrf.mxu0
    %v143 = vadd.f32 %v111, %v142
    %144 = vmatmul.f32.gmra.mxu0 %v92
    %v145 = vpop.f32.mrf.mxu0
    %v146 = vadd.f32 %v111, %v145
    %147 = vdwg.mxu0
    %v148 = vld [vmem:[#allocation2] sm:$0xff]
    %v149 = vld [vmem:[#allocation2 + $0x8] sm:$0xff]
    %v150 = vld [vmem:[#allocation2 + $0x10] sm:$0xff]
    %v151 = vld [vmem:[#allocation2 + $0x18] sm:$0xff]
    %v152 = vld [vmem:[#allocation2 + $0x20] sm:$0xff]
    %v153 = vld [vmem:[#allocation2 + $0x28] sm:$0xff]
    %vm154 = vcmask 392192
    %v156 = vsel %vm154, %v148, 0
    %v159 = vsel %vm154, %v149, 0
    %v162 = vsel %vm154, %v150, 0
    %v165 = vsel %vm154, %v151, 0
    %v168 = vsel %vm154, %v152, 0
    %v171 = vsel %vm154, %v153, 0
    %173 = vmatpush.msra.mxu0 0.0
    %174 = vmatpush.msra.mxu0 0.0
    %175 = vmatpush.msra.mxu0 0.0
    %176 = vmatpush.msra.mxu0 0.0
    %177 = vmatpush.msra.mxu0 0.0
    %178 = vmatpush.msra.mxu0 0.0
    %179 = vmatpush.msra.mxu0 0.0
    %180 = vmatpush.msra.mxu0 0.0
    %181 = vmatpush.msra.mxu0 0.0
    %182 = vmatpush.msra.mxu0 0.0
    %183 = vmatpush.msra.mxu0 %v146
    %184 = vmatpush.msra.mxu0 %v143
    %185 = vmatpush.msra.mxu0 %v140
    %186 = vmatpush.msra.mxu0 %v137
    %187 = vmatpush.msra.mxu0 %v134
    %188 = vmatpush.msra.mxu0 %v131
    %189 = vmatmul.f32.gmra.mxu0 %v156
    %v190 = vpop.f32.mrf.mxu0
    %v191 = vadd.f32 0.0, %v190
    %192 = vmatmul.f32.gmra.mxu0 %v159
    %v193 = vpop.f32.mrf.mxu0
    %v194 = vadd.f32 0.0, %v193
    %195 = vmatmul.f32.gmra.mxu0 %v162
    %v196 = vpop.f32.mrf.mxu0
    %v197 = vadd.f32 0.0, %v196
    %198 = vmatmul.f32.gmra.mxu0 %v165
    %v199 = vpop.f32.mrf.mxu0
    %v200 = vadd.f32 0.0, %v199
    %201 = vmatmul.f32.gmra.mxu0 %v168
    %v202 = vpop.f32.mrf.mxu0
    %v203 = vadd.f32 0.0, %v202
    %204 = vmatmul.f32.gmra.mxu0 %v171
    %v205 = vpop.f32.mrf.mxu0
    %v206 = vadd.f32 0.0, %v205
    %207 = vdwg.mxu0
    %vm208 = vcmp.ge.f32.partialorder %v191, 0.0
    %vm209 = vcmp.ge.f32.partialorder %v194, 0.0
    %vm210 = vcmp.ge.f32.partialorder %v197, 0.0
    %vm211 = vcmp.ge.f32.partialorder %v200, 0.0
    %vm212 = vcmp.ge.f32.partialorder %v203, 0.0
    %vm213 = vcmp.ge.f32.partialorder %v206, 0.0
    %v214 = vmul.f32 %v191, 0.01
    %v215 = vmul.f32 %v194, 0.01
    %v216 = vmul.f32 %v197, 0.01
    %v217 = vmul.f32 %v200, 0.01
    %v218 = vmul.f32 %v203, 0.01
    %v219 = vmul.f32 %v206, 0.01
    %v220 = vsel %vm208, %v191, %v214
    %v221 = vsel %vm209, %v194, %v215
    %v222 = vsel %vm210, %v197, %v216
    %v223 = vsel %vm211, %v200, %v217
    %v224 = vsel %vm212, %v203, %v218
    %v225 = vsel %vm213, %v206, %v219
    %v226 = vld [vmem:[#allocation8] sm:$0xff]
    %v227 = vld [vmem:[#allocation8 + $0x8] sm:$0xff]
    %v228 = vld [vmem:[#allocation8 + $0x10] sm:$0xff]
    %v229 = vld [vmem:[#allocation8 + $0x18] sm:$0xff]
    %v230 = vld [vmem:[#allocation8 + $0x20] sm:$0xff]
    %v231 = vld [vmem:[#allocation8 + $0x28] sm:$0xff]
    %v232 = vld [vmem:[#allocation8 + $0x30] sm:$0xff]
    %v233 = vld [vmem:[#allocation8 + $0x38] sm:$0xff]
    %v234 = vld [vmem:[#allocation8 + $0x40] sm:$0xff]
    %v235 = vld [vmem:[#allocation8 + $0x48] sm:$0xff]
    %v236 = vld [vmem:[#allocation8 + $0x50] sm:$0xff]
    %v237 = vld [vmem:[#allocation8 + $0x58] sm:$0xff]
    %v238 = vld [vmem:[#allocation8 + $0x60] sm:$0xff]
    %v239 = vld [vmem:[#allocation8 + $0x68] sm:$0xff]
    %v240 = vld [vmem:[#allocation8 + $0x70] sm:$0xff]
    %v241 = vld [vmem:[#allocation8 + $0x78] sm:$0xff]
    %v242 = vld [vmem:[%s5] sm:$0x1]
    %v244 = vperm.slane %v242, 0
    %246 = vmatpush.msra.mxu0 %v241
    %247 = vmatpush.msra.mxu0 %v240
    %248 = vmatpush.msra.mxu0 %v239
    %249 = vmatpush.msra.mxu0 %v238
    %250 = vmatpush.msra.mxu0 %v237
    %251 = vmatpush.msra.mxu0 %v236
    %252 = vmatpush.msra.mxu0 %v235
    %253 = vmatpush.msra.mxu0 %v234
    %254 = vmatpush.msra.mxu0 %v233
    %255 = vmatpush.msra.mxu0 %v232
    %256 = vmatpush.msra.mxu0 %v231
    %257 = vmatpush.msra.mxu0 %v230
    %258 = vmatpush.msra.mxu0 %v229
    %259 = vmatpush.msra.mxu0 %v228
    %260 = vmatpush.msra.mxu0 %v227
    %261 = vmatpush.msra.mxu0 %v226
    %262 = vmatmul.f32.gmra.mxu0 %v220
    %v263 = vpop.f32.mrf.mxu0
    %v264 = vadd.f32 %v244, %v263
    %265 = vmatmul.f32.gmra.mxu0 %v221
    %v266 = vpop.f32.mrf.mxu0
    %v267 = vadd.f32 %v244, %v266
    %268 = vmatmul.f32.gmra.mxu0 %v222
    %v269 = vpop.f32.mrf.mxu0
    %v270 = vadd.f32 %v244, %v269
    %271 = vmatmul.f32.gmra.mxu0 %v223
    %v272 = vpop.f32.mrf.mxu0
    %v273 = vadd.f32 %v244, %v272
    %274 = vmatmul.f32.gmra.mxu0 %v224
    %v275 = vpop.f32.mrf.mxu0
    %v276 = vadd.f32 %v244, %v275
    %277 = vmatmul.f32.gmra.mxu0 %v225
    %v278 = vpop.f32.mrf.mxu0
    %v279 = vadd.f32 %v244, %v278
    %280 = vdwg.mxu0
    %281 = vmatpush.msra.mxu0 0.0
    %282 = vmatpush.msra.mxu0 0.0
    %283 = vmatpush.msra.mxu0 0.0
    %284 = vmatpush.msra.mxu0 0.0
    %285 = vmatpush.msra.mxu0 0.0
    %286 = vmatpush.msra.mxu0 0.0
    %287 = vmatpush.msra.mxu0 0.0
    %288 = vmatpush.msra.mxu0 0.0
    %289 = vmatpush.msra.mxu0 0.0
    %290 = vmatpush.msra.mxu0 0.0
    %291 = vmatpush.msra.mxu0 %v279
    %292 = vmatpush.msra.mxu0 %v276
    %293 = vmatpush.msra.mxu0 %v273
    %294 = vmatpush.msra.mxu0 %v270
    %295 = vmatpush.msra.mxu0 %v267
    %296 = vmatpush.msra.mxu0 %v264
    %297 = vmatmul.f32.gmra.mxu0 %v156
    %v298 = vpop.f32.mrf.mxu0
    %v299 = vadd.f32 0.0, %v298
    %300 = vmatmul.f32.gmra.mxu0 %v159
    %v301 = vpop.f32.mrf.mxu0
    %v302 = vadd.f32 0.0, %v301
    %303 = vmatmul.f32.gmra.mxu0 %v162
    %v304 = vpop.f32.mrf.mxu0
    %v305 = vadd.f32 0.0, %v304
    %306 = vmatmul.f32.gmra.mxu0 %v165
    %v307 = vpop.f32.mrf.mxu0
    %v308 = vadd.f32 0.0, %v307
    %309 = vmatmul.f32.gmra.mxu0 %v168
    %v310 = vpop.f32.mrf.mxu0
    %v311 = vadd.f32 0.0, %v310
    %312 = vmatmul.f32.gmra.mxu0 %v171
    %v313 = vpop.f32.mrf.mxu0
    %v314 = vadd.f32 0.0, %v313
    %315 = vdwg.mxu0
    %316 = vst [vmem:[#allocation10] sm:$0xff] %v299
    %317 = vst [vmem:[#allocation10 + $0x8] sm:$0xff] %v302
    %318 = vst [vmem:[#allocation10 + $0x10] sm:$0xff] %v305
    %319 = vst [vmem:[#allocation10 + $0x18] sm:$0xff] %v308
    %320 = vst [vmem:[#allocation10 + $0x20] sm:$0xff] %v311
    %321 = vst [vmem:[#allocation10 + $0x28] sm:$0xff] %v314
    // Predicated region
    $region42: #{normal_gcn_forward.1} parent=1 // pred_check
      _
    $region43: #{normal_gcn_forward.1} parent=1 // pred_check_branch
      %323 = sbr.rel (0) target = $region45
    $region44: #{normal_gcn_forward.1} parent=1 // pred_region
      %325 = vsyncadd [#allocation4], 0
      %s326 = sshll.u32 [#allocation10], 4
      %s327 = int_to_ptr.vmem [resolvable:$true] %s326
      %s328 = sshll.u32 %s6, 4
      %s329 = int_to_ptr.hbm [resolvable:$true] %s328
      %334 = dma.vmem_to_hbm [thread:$0]  %s327, 768, %s329, [#allocation4], 128, 128, 8
    $region45: #{normal_gcn_forward.1} parent=1 // pred_fallthru
      _
    // Predicated region
    $region46: #{normal_gcn_forward.1} parent=1 // pred_check
      _
    $region47: #{normal_gcn_forward.1} parent=1 // pred_check_branch
      %336 = sbr.rel (0) target = $region49
    $region48: #{normal_gcn_forward.1} parent=1 // pred_region
      %338 = dma.done [#allocation4], 768
    $region49: #{normal_gcn_forward.1} parent=1 // pred_fallthru
      _
    %339 = vsyncpa [#allocation3], 1
    %340 = vsyncpa [#allocation6], 1
    %341 = vsyncpa [#allocation9], 1
    %342 = vsyncpa [#allocation4], 1

</llo_original>
